<compile_context>
chip_gen: v6e
topology: v6e:2x2x1
jax: 0.10.0
libtpu: 0.0.40
codegen_flags: <defaults>
</compile_context>

<pallas_src>
import functools

import jax
import jax.numpy as jnp
from jax.experimental import pallas as pl
from jax.experimental.pallas import tpu as pltpu


def _round_up(x, m):
    return (x + m - 1) // m * m


def _choose_batch_tile(B):
    """Pick (batch_tile, padded_batch).

    - Tile capped at 2048 rows: amortizes the ~0.35 us/grid-step pipeline cost
      while staying well inside the 16/32 MiB scoped-VMEM defaults.
    - Padded batch rounded to 512 rows -> at most 511 wasted rows.
    - For large batches prefer >= 2 grid steps so both v7x TensorCores get work
      (harmless on single-core v5e/v6e).
    """
    if B <= 512:
        tb = max(8, _round_up(B, 8))
        return tb, tb
    bp = _round_up(B, 512)
    tb = 512
    for cand in (2048, 1024):
        if bp % cand == 0 and bp // cand >= 2:
            tb = cand
            break
    return tb, bp


# ----------------------------------------------------------------------------
# Fused forward kernel (one batch tile per grid step, weights VMEM-resident):
#   a1g = relu(g @ W1^T + b1)                       # [TB,128]
#   a1h = relu(h @ W2^T + b2)                       # [TB,128]
#   a2  = relu(a1g @ Wmg + a1h @ Wmh + bm)          # [TB,128] == cat([g2|h2],1)
#   c1  = relu(a2 @ Wc1^T + bc1)                    # [TB,128]
#   out = c1 @ Wc2p^T + bc2p                        # [TB,NCp] (zero-padded classes)
# ----------------------------------------------------------------------------
def bayes_classifier_kernel(g_ref, h_ref,
                            w1t_ref, b1_ref, w2t_ref, b2_ref,
                            wmg_ref, wmh_ref, bm_ref,
                            wc1_ref, bc1_ref, wc2_ref, bc2_ref,
                            out_ref, *, bf16_epilogue):
    f32, bf16 = jnp.float32, jnp.bfloat16

    def act(acc, b_ref):
        # bias-add + ReLU epilogue: bf16 on v6e/v7x (packed VPU), f32 on v5e.
        if bf16_epilogue:
            return jnp.maximum(acc.astype(bf16) + b_ref[...].astype(bf16), 0)
        return jnp.maximum(acc + b_ref[...], 0.0).astype(bf16)

    g = g_ref[...].astype(bf16)                      # [TB, dg]
    h = h_ref[...].astype(bf16)                      # [TB, dh]

    a1g = act(jnp.dot(g, w1t_ref[...], preferred_element_type=f32), b1_ref)
    a1h = act(jnp.dot(h, w2t_ref[...], preferred_element_type=f32), b2_ref)

    # Fused "torch.cat + Linear": columns [0:64] are the global branch, [64:128]
    # the high-freq branch, exactly matching torch.cat((global_out, high_out), 1).
    a2 = act(jnp.dot(a1g, wmg_ref[...], preferred_element_type=f32)
             + jnp.dot(a1h, wmh_ref[...], preferred_element_type=f32), bm_ref)

    c1 = act(jnp.dot(a2, wc1_ref[...], preferred_element_type=f32), bc1_ref)

    out = jnp.dot(c1, wc2_ref[...], preferred_element_type=f32) + bm_final(bc2_ref)
    out_ref[...] = out.astype(out_ref.dtype)         # bf16 [TB, NCp]


def bm_final(bc2_ref):
    return bc2_ref[...]


@functools.partial(jax.jit, static_argnames=("num_classes",))
def bayesian_classifier_forward(global_feature, high_freq_feature, packed,
                                num_classes):
    B, dg = global_feature.shape
    dh = high_freq_feature.shape[1]
    nc_p = packed["wc2t"].shape[1]

    tb, bp = _choose_batch_tile(B)
    if bp != B:
        pad = ((0, bp - B), (0, 0))
        global_feature = jnp.pad(global_feature, pad)
        high_freq_feature = jnp.pad(high_freq_feature, pad)

    # bf16 epilogue only where the VPU natively handles packed bf16.
    kind = jax.devices()[0].device_kind.lower()
    bf16_epilogue = ("v6" in kind) or ("v7" in kind)

    weight_bytes = sum(int(v.size) * v.dtype.itemsize for v in packed.values())
    flops = 2 * bp * (dg * 128 + dh * 128 + 3 * 128 * 128 + 128 * nc_p)
    bytes_accessed = bp * (4 * dg + 4 * dh + 2 * nc_p) + weight_bytes

    def resident(arr):
        return pl.BlockSpec(arr.shape, lambda i: (0, 0))

    out = pl.pallas_call(
        functools.partial(bayes_classifier_kernel, bf16_epilogue=bf16_epilogue),
        out_shape=jax.ShapeDtypeStruct((bp, nc_p), jnp.bfloat16),
        grid=(bp // tb,),
        in_specs=[
            pl.BlockSpec((tb, dg), lambda i: (i, 0)),    # global features (f32)
            pl.BlockSpec((tb, dh), lambda i: (i, 0)),    # high-freq features (f32)
            resident(packed["w1t"]), resident(packed["b1"]),
            resident(packed["w2t"]), resident(packed["b2"]),
            resident(packed["wmg"]), resident(packed["wmh"]), resident(packed["bm"]),
            resident(packed["wc1t"]), resident(packed["bc1"]),
            resident(packed["wc2t"]), resident(packed["bc2"]),
        ],
        out_specs=pl.BlockSpec((tb, nc_p), lambda i: (i, 0)),
        compiler_params=pltpu.CompilerParams(
            dimension_semantics=("parallel",),
            vmem_limit_bytes=32 * 1024 * 1024),
        cost_estimate=pl.CostEstimate(
            flops=flops, transcendentals=0, bytes_accessed=bytes_accessed),
    )(global_feature, high_freq_feature,
      packed["w1t"], packed["b1"], packed["w2t"], packed["b2"],
      packed["wmg"], packed["wmh"], packed["bm"],
      packed["wc1t"], packed["bc1"], packed["wc2t"], packed["bc2"])

    # Slice off padded rows/classes; the f32 cast fuses with the slice and keeps
    # the original (f32 logits) interface.  Skip if downstream accepts padded bf16.
    return out[:B, :num_classes].astype(jnp.float32)


# ----------------------------------------------------------------------------
# Deterministic parameter construction (matches __init__ shapes) + packing.
# ----------------------------------------------------------------------------
def make_params(key, global_input_dim, high_input_dim, num_classes):
    ks = jax.random.split(key, 16)

    def linear(kw, kb, out_f, in_f):
        scale = 1.0 / jnp.sqrt(in_f)
        w = jax.random.uniform(kw, (out_f, in_f), jnp.float32, -scale, scale)
        b = jax.random.uniform(kb, (out_f,), jnp.float32, -scale, scale)
        return w, b

    def bbb_linear(kmu, keps, kbmu, kbeps, out_f, in_f):
        # W = W_mu + softplus(W_rho) * eps with rho init = -3 (stable softplus).
        sigma = jax.nn.softplus(jnp.float32(-3.0))
        w = (0.1 * jax.random.normal(kmu, (out_f, in_f), jnp.float32)
             + sigma * jax.random.normal(keps, (out_f, in_f), jnp.float32))
        b = (0.1 * jax.random.normal(kbmu, (out_f,), jnp.float32)
             + sigma * jax.random.normal(kbeps, (out_f,), jnp.float32))
        return w, b

    w1, b1 = bbb_linear(ks[0], ks[1], ks[2], ks[3], 128, global_input_dim)
    wg, bg = linear(ks[4], ks[5], 64, 128)
    w2, b2 = bbb_linear(ks[6], ks[7], ks[8], ks[9], 128, high_input_dim)
    wh, bh = linear(ks[10], ks[11], 64, 128)
    wc1, bc1 = linear(ks[12], ks[13], 128, 128)
    wc2, bc2 = linear(ks[14], ks[15], num_classes, 128)

    return dict(w1=w1, b1=b1, wg=wg, bg=bg, w2=w2, b2=b2, wh=wh, bh=bh,
                wc1=wc1, bc1=bc1, wc2=wc2, bc2=bc2)


def pack_params(raw, num_classes):
    nc_p = _round_up(num_classes, 128)     # lane-dense classifier output
    bf16 = lambda a: a.astype(jnp.bfloat16)

    # Branch input layers (sampled BBBLinear weights), transposed for x @ W^T.
    w1t = bf16(raw["w1"].T)                                  # [dg, 128]
    w2t = bf16(raw["w2"].T)                                  # [dh, 128]
    b1 = raw["b1"][None, :]                                  # [1, 128] f32
    b2 = raw["b2"][None, :]

    # Mid layer: the two Linear(128, 64) weights zero-padded to 128 output
    # lanes so a1g @ wmg + a1h @ wmh has columns == torch.cat([g2, h2], dim=1).
    wmg = jnp.zeros((128, 128), jnp.float32).at[:, :64].set(raw["wg"].T)
    wmh = jnp.zeros((128, 128), jnp.float32).at[:, 64:].set(raw["wh"].T)
    bm = jnp.concatenate([raw["bg"], raw["bh"]])[None, :]    # [1, 128]

    # Classifier head; final layer zero-padded to nc_p lanes (unmasked stores).
    wc1t = bf16(raw["wc1"].T)                                # [128, 128]
    bc1 = raw["bc1"][None, :]
    wc2t = jnp.zeros((128, nc_p), jnp.float32).at[:, :num_classes].set(raw["wc2"].T)
    bc2 = jnp.zeros((1, nc_p), jnp.float32).at[:, :num_classes].set(raw["bc2"][None, :])

    return dict(w1t=w1t, b1=b1, w2t=w2t, b2=b2,
                wmg=bf16(wmg), wmh=bf16(wmh), bm=bm,
                wc1t=wc1t, bc1=bc1, wc2t=bf16(wc2t), bc2=bc2)


def reference_forward(g, h, raw):
    # Pure-f32 JAX reference following the original PyTorch dataflow exactly.
    relu = lambda v: jnp.maximum(v, 0.0)
    go = relu(relu(g @ raw["w1"].T + raw["b1"]) @ raw["wg"].T + raw["bg"])
    ho = relu(relu(h @ raw["w2"].T + raw["b2"]) @ raw["wh"].T + raw["bh"])
    c = jnp.concatenate([go, ho], axis=1)
    return relu(c @ raw["wc1"].T + raw["bc1"]) @ raw["wc2"].T + raw["bc2"]


if __name__ == "__main__":
    num_classes = 10
    batch = 8
    global_input_dim = 32
    high_input_dim = 48

    key = jax.random.PRNGKey(0)
    kg, kh, kp = jax.random.split(key, 3)
    global_feature = jax.random.normal(kg, (batch, global_input_dim), jnp.float32)
    high_freq_feature = jax.random.normal(kh, (batch, high_input_dim), jnp.float32)

    raw = make_params(kp, global_input_dim, high_input_dim, num_classes)
    packed = pack_params(raw, num_classes)

    out = bayesian_classifier_forward(global_feature, high_freq_feature, packed,
                                      num_classes)
    out = jax.block_until_ready(out)
    assert out.shape == (batch, num_classes)
    assert out.dtype == jnp.float32

    ref = reference_forward(global_feature, high_freq_feature, raw)
    err = float(jnp.max(jnp.abs(out - ref)))
    tol = 5e-2 * (1.0 + float(jnp.max(jnp.abs(ref))))   # bf16 weights/activations
    assert err <= tol, f"mismatch vs JAX reference: max|diff|={err}, tol={tol}"

    print("KERNEL_OK")
</pallas_src>

<mosaic_0001>
module attributes {stable_mosaic.version = 11 : i64} {
  func.func @bayes_classifier_kernel(%arg0: i32, %arg1: memref<8x32xf32, #tpu.memory_space<vmem>>, %arg2: memref<8x48xf32, #tpu.memory_space<vmem>>, %arg3: memref<32x128xbf16, #tpu.memory_space<vmem>>, %arg4: memref<1x128xf32, #tpu.memory_space<vmem>>, %arg5: memref<48x128xbf16, #tpu.memory_space<vmem>>, %arg6: memref<1x128xf32, #tpu.memory_space<vmem>>, %arg7: memref<128x128xbf16, #tpu.memory_space<vmem>>, %arg8: memref<128x128xbf16, #tpu.memory_space<vmem>>, %arg9: memref<1x128xf32, #tpu.memory_space<vmem>>, %arg10: memref<128x128xbf16, #tpu.memory_space<vmem>>, %arg11: memref<1x128xf32, #tpu.memory_space<vmem>>, %arg12: memref<128x128xbf16, #tpu.memory_space<vmem>>, %arg13: memref<1x128xf32, #tpu.memory_space<vmem>>, %arg14: memref<8x128xbf16, #tpu.memory_space<vmem>>) attributes {dimension_semantics = [#tpu.dimension_semantics<parallel>], iteration_bounds = array<i64: 1>, scalar_prefetch = 0 : i64, scratch_operands = 0 : i64, tpu.core_type = #tpu.core_type<tc>, window_params = [{transform_indices = @transform_0, window_bounds = array<i64: 8, 32>}, {transform_indices = @transform_1, window_bounds = array<i64: 8, 48>}, {pipeline_mode = #tpu.pipeline_mode<synchronous>, transform_indices = @transform_2, window_bounds = array<i64: 32, 128>}, {pipeline_mode = #tpu.pipeline_mode<synchronous>, transform_indices = @transform_3, window_bounds = array<i64: 1, 128>}, {pipeline_mode = #tpu.pipeline_mode<synchronous>, transform_indices = @transform_4, window_bounds = array<i64: 48, 128>}, {pipeline_mode = #tpu.pipeline_mode<synchronous>, transform_indices = @transform_5, window_bounds = array<i64: 1, 128>}, {pipeline_mode = #tpu.pipeline_mode<synchronous>, transform_indices = @transform_6, window_bounds = array<i64: 128, 128>}, {pipeline_mode = #tpu.pipeline_mode<synchronous>, transform_indices = @transform_7, window_bounds = array<i64: 128, 128>}, {pipeline_mode = #tpu.pipeline_mode<synchronous>, transform_indices = @transform_8, window_bounds = array<i64: 1, 128>}, {pipeline_mode = #tpu.pipeline_mode<synchronous>, transform_indices = @transform_9, window_bounds = array<i64: 128, 128>}, {pipeline_mode = #tpu.pipeline_mode<synchronous>, transform_indices = @transform_10, window_bounds = array<i64: 1, 128>}, {pipeline_mode = #tpu.pipeline_mode<synchronous>, transform_indices = @transform_11, window_bounds = array<i64: 128, 128>}, {pipeline_mode = #tpu.pipeline_mode<synchronous>, transform_indices = @transform_12, window_bounds = array<i64: 1, 128>}, {transform_indices = @transform_13, window_bounds = array<i64: 8, 128>}]} {
    %c0 = arith.constant 0 : index
    %c0_0 = arith.constant 0 : index
    %0 = vector.load %arg1[%c0, %c0_0] : memref<8x32xf32, #tpu.memory_space<vmem>>, vector<8x32xf32>
    %1 = arith.truncf %0 : vector<8x32xf32> to vector<8x32xbf16>
    %c0_1 = arith.constant 0 : index
    %c0_2 = arith.constant 0 : index
    %2 = vector.load %arg2[%c0_1, %c0_2] : memref<8x48xf32, #tpu.memory_space<vmem>>, vector<8x48xf32>
    %3 = arith.truncf %2 : vector<8x48xf32> to vector<8x48xbf16>
    %c0_3 = arith.constant 0 : index
    %c0_4 = arith.constant 0 : index
    %4 = vector.load %arg3[%c0_3, %c0_4] : memref<32x128xbf16, #tpu.memory_space<vmem>>, vector<32x128xbf16>
    %cst = arith.constant dense<0.000000e+00> : vector<8x128xf32>
    %5 = tpu.matmul %1, %4, %cst {dimension_numbers = #tpu.dot_dimension_numbers<[1], [0], [0], [1], [0, 0, 1, 1], [], []>} : vector<8x32xbf16>, vector<32x128xbf16>, vector<8x128xf32> -> vector<8x128xf32>
    %c0_5 = arith.constant 0 : index
    %c0_6 = arith.constant 0 : index
    %6 = vector.load %arg4[%c0_5, %c0_6] : memref<1x128xf32, #tpu.memory_space<vmem>>, vector<1x128xf32>
    %7 = vector.broadcast %6 : vector<1x128xf32> to vector<8x128xf32>
    %8 = arith.addf %5, %7 : vector<8x128xf32>
    %cst_7 = arith.constant 0.000000e+00 : f32
    %9 = vector.broadcast %cst_7 : f32 to vector<8x128xf32>
    %10 = arith.maximumf %8, %9 : vector<8x128xf32>
    %11 = arith.truncf %10 : vector<8x128xf32> to vector<8x128xbf16>
    %c0_8 = arith.constant 0 : index
    %c0_9 = arith.constant 0 : index
    %12 = vector.load %arg5[%c0_8, %c0_9] : memref<48x128xbf16, #tpu.memory_space<vmem>>, vector<48x128xbf16>
    %cst_10 = arith.constant dense<0.000000e+00> : vector<8x128xf32>
    %13 = tpu.matmul %3, %12, %cst_10 {dimension_numbers = #tpu.dot_dimension_numbers<[1], [0], [0], [1], [0, 0, 1, 1], [], []>} : vector<8x48xbf16>, vector<48x128xbf16>, vector<8x128xf32> -> vector<8x128xf32>
    %c0_11 = arith.constant 0 : index
    %c0_12 = arith.constant 0 : index
    %14 = vector.load %arg6[%c0_11, %c0_12] : memref<1x128xf32, #tpu.memory_space<vmem>>, vector<1x128xf32>
    %15 = vector.broadcast %14 : vector<1x128xf32> to vector<8x128xf32>
    %16 = arith.addf %13, %15 : vector<8x128xf32>
    %cst_13 = arith.constant 0.000000e+00 : f32
    %17 = vector.broadcast %cst_13 : f32 to vector<8x128xf32>
    %18 = arith.maximumf %16, %17 : vector<8x128xf32>
    %19 = arith.truncf %18 : vector<8x128xf32> to vector<8x128xbf16>
    %c0_14 = arith.constant 0 : index
    %c0_15 = arith.constant 0 : index
    %20 = vector.load %arg7[%c0_14, %c0_15] : memref<128x128xbf16, #tpu.memory_space<vmem>>, vector<128x128xbf16>
    %cst_16 = arith.constant dense<0.000000e+00> : vector<8x128xf32>
    %21 = tpu.matmul %11, %20, %cst_16 {dimension_numbers = #tpu.dot_dimension_numbers<[1], [0], [0], [1], [0, 0, 1, 1], [], []>} : vector<8x128xbf16>, vector<128x128xbf16>, vector<8x128xf32> -> vector<8x128xf32>
    %c0_17 = arith.constant 0 : index
    %c0_18 = arith.constant 0 : index
    %22 = vector.load %arg8[%c0_17, %c0_18] : memref<128x128xbf16, #tpu.memory_space<vmem>>, vector<128x128xbf16>
    %cst_19 = arith.constant dense<0.000000e+00> : vector<8x128xf32>
    %23 = tpu.matmul %19, %22, %cst_19 {dimension_numbers = #tpu.dot_dimension_numbers<[1], [0], [0], [1], [0, 0, 1, 1], [], []>} : vector<8x128xbf16>, vector<128x128xbf16>, vector<8x128xf32> -> vector<8x128xf32>
    %24 = arith.addf %21, %23 : vector<8x128xf32>
    %c0_20 = arith.constant 0 : index
    %c0_21 = arith.constant 0 : index
    %25 = vector.load %arg9[%c0_20, %c0_21] : memref<1x128xf32, #tpu.memory_space<vmem>>, vector<1x128xf32>
    %26 = vector.broadcast %25 : vector<1x128xf32> to vector<8x128xf32>
    %27 = arith.addf %24, %26 : vector<8x128xf32>
    %cst_22 = arith.constant 0.000000e+00 : f32
    %28 = vector.broadcast %cst_22 : f32 to vector<8x128xf32>
    %29 = arith.maximumf %27, %28 : vector<8x128xf32>
    %30 = arith.truncf %29 : vector<8x128xf32> to vector<8x128xbf16>
    %c0_23 = arith.constant 0 : index
    %c0_24 = arith.constant 0 : index
    %31 = vector.load %arg10[%c0_23, %c0_24] : memref<128x128xbf16, #tpu.memory_space<vmem>>, vector<128x128xbf16>
    %cst_25 = arith.constant dense<0.000000e+00> : vector<8x128xf32>
    %32 = tpu.matmul %30, %31, %cst_25 {dimension_numbers = #tpu.dot_dimension_numbers<[1], [0], [0], [1], [0, 0, 1, 1], [], []>} : vector<8x128xbf16>, vector<128x128xbf16>, vector<8x128xf32> -> vector<8x128xf32>
    %c0_26 = arith.constant 0 : index
    %c0_27 = arith.constant 0 : index
    %33 = vector.load %arg11[%c0_26, %c0_27] : memref<1x128xf32, #tpu.memory_space<vmem>>, vector<1x128xf32>
    %34 = vector.broadcast %33 : vector<1x128xf32> to vector<8x128xf32>
    %35 = arith.addf %32, %34 : vector<8x128xf32>
    %cst_28 = arith.constant 0.000000e+00 : f32
    %36 = vector.broadcast %cst_28 : f32 to vector<8x128xf32>
    %37 = arith.maximumf %35, %36 : vector<8x128xf32>
    %38 = arith.truncf %37 : vector<8x128xf32> to vector<8x128xbf16>
    %c0_29 = arith.constant 0 : index
    %c0_30 = arith.constant 0 : index
    %39 = vector.load %arg12[%c0_29, %c0_30] : memref<128x128xbf16, #tpu.memory_space<vmem>>, vector<128x128xbf16>
    %cst_31 = arith.constant dense<0.000000e+00> : vector<8x128xf32>
    %40 = tpu.matmul %38, %39, %cst_31 {dimension_numbers = #tpu.dot_dimension_numbers<[1], [0], [0], [1], [0, 0, 1, 1], [], []>} : vector<8x128xbf16>, vector<128x128xbf16>, vector<8x128xf32> -> vector<8x128xf32>
    %c0_32 = arith.constant 0 : index
    %c0_33 = arith.constant 0 : index
    %41 = vector.load %arg13[%c0_32, %c0_33] : memref<1x128xf32, #tpu.memory_space<vmem>>, vector<1x128xf32>
    %42 = vector.broadcast %41 : vector<1x128xf32> to vector<8x128xf32>
    %43 = arith.addf %40, %42 : vector<8x128xf32>
    %44 = arith.truncf %43 : vector<8x128xf32> to vector<8x128xbf16>
    %c0_34 = arith.constant 0 : index
    %c0_35 = arith.constant 0 : index
    %45 = vector.load %arg14[%c0_34, %c0_35] : memref<8x128xbf16, #tpu.memory_space<vmem>>, vector<8x128xbf16>
    tpu.vector_store %arg14[%c0_34, %c0_35], %44 {strides = array<i32>} : memref<8x128xbf16, #tpu.memory_space<vmem>>, vector<8x128xbf16>,
    return
  }
  func.func @transform_0(%arg0: i32) -> (i32, i32) {
    %c0_i32 = arith.constant 0 : i32
    %c0_i32_0 = arith.constant 0 : i32
    return %arg0, %c0_i32 : i32, i32
  }
  func.func @transform_1(%arg0: i32) -> (i32, i32) {
    %c0_i32 = arith.constant 0 : i32
    %c0_i32_0 = arith.constant 0 : i32
    return %arg0, %c0_i32 : i32, i32
  }
  func.func @transform_2(%arg0: i32) -> (i32, i32) {
    %c0_i32 = arith.constant 0 : i32
    %c0_i32_0 = arith.constant 0 : i32
    %c0_i32_1 = arith.constant 0 : i32
    return %c0_i32, %c0_i32_0 : i32, i32
  }
  func.func @transform_3(%arg0: i32) -> (i32, i32) {
    %c0_i32 = arith.constant 0 : i32
    %c0_i32_0 = arith.constant 0 : i32
    %c0_i32_1 = arith.constant 0 : i32
    return %c0_i32, %c0_i32_0 : i32, i32
  }
  func.func @transform_4(%arg0: i32) -> (i32, i32) {
    %c0_i32 = arith.constant 0 : i32
    %c0_i32_0 = arith.constant 0 : i32
    %c0_i32_1 = arith.constant 0 : i32
    return %c0_i32, %c0_i32_0 : i32, i32
  }
  func.func @transform_5(%arg0: i32) -> (i32, i32) {
    %c0_i32 = arith.constant 0 : i32
    %c0_i32_0 = arith.constant 0 : i32
    %c0_i32_1 = arith.constant 0 : i32
    return %c0_i32, %c0_i32_0 : i32, i32
  }
  func.func @transform_6(%arg0: i32) -> (i32, i32) {
    %c0_i32 = arith.constant 0 : i32
    %c0_i32_0 = arith.constant 0 : i32
    %c0_i32_1 = arith.constant 0 : i32
    return %c0_i32, %c0_i32_0 : i32, i32
  }
  func.func @transform_7(%arg0: i32) -> (i32, i32) {
    %c0_i32 = arith.constant 0 : i32
    %c0_i32_0 = arith.constant 0 : i32
    %c0_i32_1 = arith.constant 0 : i32
    return %c0_i32, %c0_i32_0 : i32, i32
  }
  func.func @transform_8(%arg0: i32) -> (i32, i32) {
    %c0_i32 = arith.constant 0 : i32
    %c0_i32_0 = arith.constant 0 : i32
    %c0_i32_1 = arith.constant 0 : i32
    return %c0_i32, %c0_i32_0 : i32, i32
  }
  func.func @transform_9(%arg0: i32) -> (i32, i32) {
    %c0_i32 = arith.constant 0 : i32
    %c0_i32_0 = arith.constant 0 : i32
    %c0_i32_1 = arith.constant 0 : i32
    return %c0_i32, %c0_i32_0 : i32, i32
  }
  func.func @transform_10(%arg0: i32) -> (i32, i32) {
    %c0_i32 = arith.constant 0 : i32
    %c0_i32_0 = arith.constant 0 : i32
    %c0_i32_1 = arith.constant 0 : i32
    return %c0_i32, %c0_i32_0 : i32, i32
  }
  func.func @transform_11(%arg0: i32) -> (i32, i32) {
    %c0_i32 = arith.constant 0 : i32
    %c0_i32_0 = arith.constant 0 : i32
    %c0_i32_1 = arith.constant 0 : i32
    return %c0_i32, %c0_i32_0 : i32, i32
  }
  func.func @transform_12(%arg0: i32) -> (i32, i32) {
    %c0_i32 = arith.constant 0 : i32
    %c0_i32_0 = arith.constant 0 : i32
    %c0_i32_1 = arith.constant 0 : i32
    return %c0_i32, %c0_i32_0 : i32, i32
  }
  func.func @transform_13(%arg0: i32) -> (i32, i32) {
    %c0_i32 = arith.constant 0 : i32
    %c0_i32_0 = arith.constant 0 : i32
    return %arg0, %c0_i32 : i32, i32
  }
}

</mosaic_0001>

<llo_original>
// kernel: bayesian_classifier_forward.1
$region0: #{bayesian_classifier_forward.1}
  #allocation0 [shape = 'u32[]', space=smem, size = 0x4, offset = 0x4, fixed_abs, tag = 'smem constant byte address 0x4 - core index']
  #allocation1 [shape = 'u32[144,128]{1,0:T(1,128)}', space=vmem, size = 0x12000, scoped, tag = 'internal scratch']
  %s0 = inlined_call_operand.hbm [shape: f32[8,32], index: 0, kind: input, shape index: {}]
  %s1 = inlined_call_operand.hbm [shape: f32[8,48], index: 1, kind: input, shape index: {}]
  %s2 = inlined_call_operand.hbm [shape: bf16[32,128], index: 2, kind: input, shape index: {}]
  %s3 = inlined_call_operand.vmem [shape: f32[1,128], index: 3, kind: input, shape index: {}]
  %s4 = inlined_call_operand.hbm [shape: bf16[48,128], index: 4, kind: input, shape index: {}]
  %s5 = inlined_call_operand.vmem [shape: f32[1,128], index: 5, kind: input, shape index: {}]
  %s6 = inlined_call_operand.hbm [shape: bf16[128,128], index: 6, kind: input, shape index: {}]
  %s7 = inlined_call_operand.hbm [shape: bf16[128,128], index: 7, kind: input, shape index: {}]
  %s8 = inlined_call_operand.vmem [shape: f32[1,128], index: 8, kind: input, shape index: {}]
  %s9 = inlined_call_operand.hbm [shape: bf16[128,128], index: 9, kind: input, shape index: {}]
  %s10 = inlined_call_operand.vmem [shape: f32[1,128], index: 10, kind: input, shape index: {}]
  %s11 = inlined_call_operand.hbm [shape: bf16[128,128], index: 11, kind: input, shape index: {}]
  %s12 = inlined_call_operand.vmem [shape: f32[1,128], index: 12, kind: input, shape index: {}]
  %s13 = inlined_call_operand.vmem [shape: bf16[8,128], index: 13, kind: output, shape index: {}]
  %s14 = sld [smem:[#allocation0]]
  $region94: #{bayesian_classifier_forward.1} parent=0
    _
  %s16 = ssub.s32 1, %s14
  %s17 = scalar_select 0, %s16, %s14
  $region1: #{bayesian_classifier_forward.1} parent=0
    #allocation2 [shape = 'u8[4096]{0}', space=vmem, size = 0x1000, scoped, tag = 'input window, operand 0, single buffered']
    #allocation3 [shape = 's32[1]{0}', space=sflag, size = 0x4, scoped, tag = 'scoped memory for bayesian_classifier_forward.1']
    #allocation4 [shape = 'u8[4096]{0}', space=vmem, size = 0x1000, scoped, tag = 'input window, operand 1, single buffered']
    #allocation5 [shape = 's32[1]{0}', space=sflag, size = 0x4, scoped, tag = 'scoped memory for bayesian_classifier_forward.1']
    #allocation6 [shape = 'u8[8192]{0}', space=vmem, size = 0x2000, scoped, tag = 'input window, operand 2, single buffered']
    #allocation7 [shape = 'u8[12288]{0}', space=vmem, size = 0x3000, scoped, tag = 'input window, operand 4, single buffered']
    #allocation8 [shape = 's32[1]{0}', space=sflag, size = 0x4, scoped, tag = 'scoped memory for bayesian_classifier_forward.1']
    #allocation9 [shape = 'u8[32768]{0}', space=vmem, size = 0x8000, scoped, tag = 'input window, operand 6, single buffered']
    #allocation10 [shape = 'u8[32768]{0}', space=vmem, size = 0x8000, scoped, tag = 'input window, operand 7, single buffered']
    #allocation11 [shape = 's32[1]{0}', space=sflag, size = 0x4, scoped, tag = 'scoped memory for bayesian_classifier_forward.1']
    #allocation12 [shape = 'u8[32768]{0}', space=vmem, size = 0x8000, scoped, tag = 'input window, operand 9, single buffered']
    #allocation13 [shape = 'u8[32768]{0}', space=vmem, size = 0x8000, scoped, tag = 'input window, operand 11, single buffered']
    #allocation14 [shape = 's32[1]{0}', space=sflag, size = 0x4, scoped, tag = 'scoped memory for bayesian_classifier_forward.1']
    %18 = vsyncpa [#allocation3], 0
    %19 = vsyncpa [#allocation5], 0
    %20 = vsyncpa [#allocation8], 0
    %21 = vsyncpa [#allocation11], 0
    %22 = vsyncpa [#allocation14], 0
    // Predicated region
    $region2: #{bayesian_classifier_forward.1} parent=1 // pred_check
      _
    $region3: #{bayesian_classifier_forward.1} parent=1 // pred_check_branch
      %24 = sbr.rel (0) target = $region5
    $region4: #{bayesian_classifier_forward.1} parent=1 // pred_region
      %s26 = ssub.s32 128, 128
      %27 = vsyncadd [#allocation3], %s26
      %s29 = sshll.u32 [#allocation2], 4
      %s30 = int_to_ptr.vmem [resolvable:$true] %s29
      %32 = dma.hbm_to_vmem [thread:$0]  %s0, 128, %s30, [#allocation3]
    $region5: #{bayesian_classifier_forward.1} parent=1 // pred_fallthru
      _
    // Predicated region
    $region6: #{bayesian_classifier_forward.1} parent=1 // pred_check
      _
    $region7: #{bayesian_classifier_forward.1} parent=1 // pred_check_branch
      %34 = sbr.rel (0) target = $region9
    $region8: #{bayesian_classifier_forward.1} parent=1 // pred_region
      %s36 = ssub.s32 128, 128
      %37 = vsyncadd [#allocation5], %s36
      %s39 = sshll.u32 [#allocation4], 4
      %s40 = int_to_ptr.vmem [resolvable:$true] %s39
      %42 = dma.hbm_to_vmem [thread:$0]  %s1, 128, %s40, [#allocation5]
    $region9: #{bayesian_classifier_forward.1} parent=1 // pred_fallthru
      _
    // Predicated region
    $region10: #{bayesian_classifier_forward.1} parent=1 // pred_check
      _
    $region11: #{bayesian_classifier_forward.1} parent=1 // pred_check_branch
      %44 = sbr.rel (0) target = $region13
    $region12: #{bayesian_classifier_forward.1} parent=1 // pred_region
      %s46 = ssub.s32 256, 256
      %47 = vsyncadd [#allocation5], %s46
      %s48 = sshll.u32 [#allocation6], 4
      %s49 = int_to_ptr.vmem [resolvable:$true] %s48
      %54 = dma.hbm_to_vmem [thread:$0]  %s2, 256, %s49, [#allocation5], 64, 64, 4
    $region13: #{bayesian_classifier_forward.1} parent=1 // pred_fallthru
      _
    // Predicated region
    $region14: #{bayesian_classifier_forward.1} parent=1 // pred_check
      _
    $region15: #{bayesian_classifier_forward.1} parent=1 // pred_check_branch
      %56 = sbr.rel (0) target = $region17
    $region16: #{bayesian_classifier_forward.1} parent=1 // pred_region
      _
    $region17: #{bayesian_classifier_forward.1} parent=1 // pred_fallthru
      _
    // Predicated region
    $region18: #{bayesian_classifier_forward.1} parent=1 // pred_check
      _
    $region19: #{bayesian_classifier_forward.1} parent=1 // pred_check_branch
      %58 = sbr.rel (0) target = $region21
    $region20: #{bayesian_classifier_forward.1} parent=1 // pred_region
      %s60 = ssub.s32 384, 384
      %61 = vsyncadd [#allocation8], %s60
      %s62 = sshll.u32 [#allocation7], 4
      %s63 = int_to_ptr.vmem [resolvable:$true] %s62
      %68 = dma.hbm_to_vmem [thread:$0]  %s4, 384, %s63, [#allocation8], 64, 64, 4
    $region21: #{bayesian_classifier_forward.1} parent=1 // pred_fallthru
      _
    // Predicated region
    $region22: #{bayesian_classifier_forward.1} parent=1 // pred_check
      _
    $region23: #{bayesian_classifier_forward.1} parent=1 // pred_check_branch
      %70 = sbr.rel (0) target = $region25
    $region24: #{bayesian_classifier_forward.1} parent=1 // pred_region
      _
    $region25: #{bayesian_classifier_forward.1} parent=1 // pred_fallthru
      _
    // Predicated region
    $region26: #{bayesian_classifier_forward.1} parent=1 // pred_check
      _
    $region27: #{bayesian_classifier_forward.1} parent=1 // pred_check_branch
      %72 = sbr.rel (0) target = $region29
    $region28: #{bayesian_classifier_forward.1} parent=1 // pred_region
      %s74 = ssub.s32 1024, 1024
      %75 = vsyncadd [#allocation8], %s74
      %s76 = sshll.u32 [#allocation9], 4
      %s77 = int_to_ptr.vmem [resolvable:$true] %s76
      %82 = dma.hbm_to_vmem [thread:$0]  %s6, 1024, %s77, [#allocation8], 64, 64, 4
    $region29: #{bayesian_classifier_forward.1} parent=1 // pred_fallthru
      _
    // Predicated region
    $region30: #{bayesian_classifier_forward.1} parent=1 // pred_check
      _
    $region31: #{bayesian_classifier_forward.1} parent=1 // pred_check_branch
      %84 = sbr.rel (0) target = $region33
    $region32: #{bayesian_classifier_forward.1} parent=1 // pred_region
      %s86 = ssub.s32 1024, 1024
      %87 = vsyncadd [#allocation11], %s86
      %s88 = sshll.u32 [#allocation10], 4
      %s89 = int_to_ptr.vmem [resolvable:$true] %s88
      %94 = dma.hbm_to_vmem [thread:$0]  %s7, 1024, %s89, [#allocation11], 64, 64, 4
    $region33: #{bayesian_classifier_forward.1} parent=1 // pred_fallthru
      _
    // Predicated region
    $region34: #{bayesian_classifier_forward.1} parent=1 // pred_check
      _
    $region35: #{bayesian_classifier_forward.1} parent=1 // pred_check_branch
      %96 = sbr.rel (0) target = $region37
    $region36: #{bayesian_classifier_forward.1} parent=1 // pred_region
      _
    $region37: #{bayesian_classifier_forward.1} parent=1 // pred_fallthru
      _
    // Predicated region
    $region38: #{bayesian_classifier_forward.1} parent=1 // pred_check
      _
    $region39: #{bayesian_classifier_forward.1} parent=1 // pred_check_branch
      %98 = sbr.rel (0) target = $region41
    $region40: #{bayesian_classifier_forward.1} parent=1 // pred_region
      %s100 = ssub.s32 1024, 1024
      %101 = vsyncadd [#allocation11], %s100
      %s102 = sshll.u32 [#allocation12], 4
      %s103 = int_to_ptr.vmem [resolvable:$true] %s102
      %108 = dma.hbm_to_vmem [thread:$0]  %s9, 1024, %s103, [#allocation11], 64, 64, 4
    $region41: #{bayesian_classifier_forward.1} parent=1 // pred_fallthru
      _
    // Predicated region
    $region42: #{bayesian_classifier_forward.1} parent=1 // pred_check
      _
    $region43: #{bayesian_classifier_forward.1} parent=1 // pred_check_branch
      %110 = sbr.rel (0) target = $region45
    $region44: #{bayesian_classifier_forward.1} parent=1 // pred_region
      _
    $region45: #{bayesian_classifier_forward.1} parent=1 // pred_fallthru
      _
    // Predicated region
    $region46: #{bayesian_classifier_forward.1} parent=1 // pred_check
      _
    $region47: #{bayesian_classifier_forward.1} parent=1 // pred_check_branch
      %112 = sbr.rel (0) target = $region49
    $region48: #{bayesian_classifier_forward.1} parent=1 // pred_region
      %s114 = ssub.s32 1024, 1024
      %115 = vsyncadd [#allocation14], %s114
      %s116 = sshll.u32 [#allocation13], 4
      %s117 = int_to_ptr.vmem [resolvable:$true] %s116
      %122 = dma.hbm_to_vmem [thread:$0]  %s11, 1024, %s117, [#allocation14], 64, 64, 4
    $region49: #{bayesian_classifier_forward.1} parent=1 // pred_fallthru
      _
    // Predicated region
    $region50: #{bayesian_classifier_forward.1} parent=1 // pred_check
      _
    $region51: #{bayesian_classifier_forward.1} parent=1 // pred_check_branch
      %124 = sbr.rel (0) target = $region53
    $region52: #{bayesian_classifier_forward.1} parent=1 // pred_region
      _
    $region53: #{bayesian_classifier_forward.1} parent=1 // pred_fallthru
      _
    // Predicated region
    $region54: #{bayesian_classifier_forward.1} parent=1 // pred_check
      _
    $region55: #{bayesian_classifier_forward.1} parent=1 // pred_check_branch
      %126 = sbr.rel (0) target = $region57
    $region56: #{bayesian_classifier_forward.1} parent=1 // pred_region
      %127 = dma.done [#allocation3], 128
    $region57: #{bayesian_classifier_forward.1} parent=1 // pred_fallthru
      _
    // Predicated region
    $region58: #{bayesian_classifier_forward.1} parent=1 // pred_check
      _
    $region59: #{bayesian_classifier_forward.1} parent=1 // pred_check_branch
      %129 = sbr.rel (0) target = $region61
    $region60: #{bayesian_classifier_forward.1} parent=1 // pred_region
      %130 = dma.done [#allocation5], 128
    $region61: #{bayesian_classifier_forward.1} parent=1 // pred_fallthru
      _
    // Predicated region
    $region62: #{bayesian_classifier_forward.1} parent=1 // pred_check
      _
    $region63: #{bayesian_classifier_forward.1} parent=1 // pred_check_branch
      %132 = sbr.rel (0) target = $region65
    $region64: #{bayesian_classifier_forward.1} parent=1 // pred_region
      %133 = dma.done [#allocation5], 256
    $region65: #{bayesian_classifier_forward.1} parent=1 // pred_fallthru
      _
    // Predicated region
    $region66: #{bayesian_classifier_forward.1} parent=1 // pred_check
      _
    $region67: #{bayesian_classifier_forward.1} parent=1 // pred_check_branch
      %135 = sbr.rel (0) target = $region69
    $region68: #{bayesian_classifier_forward.1} parent=1 // pred_region
      %136 = dma.done [#allocation8], 384
    $region69: #{bayesian_classifier_forward.1} parent=1 // pred_fallthru
      _
    // Predicated region
    $region70: #{bayesian_classifier_forward.1} parent=1 // pred_check
      _
    $region71: #{bayesian_classifier_forward.1} parent=1 // pred_check_branch
      %138 = sbr.rel (0) target = $region73
    $region72: #{bayesian_classifier_forward.1} parent=1 // pred_region
      %139 = dma.done [#allocation8], 1024
    $region73: #{bayesian_classifier_forward.1} parent=1 // pred_fallthru
      _
    // Predicated region
    $region74: #{bayesian_classifier_forward.1} parent=1 // pred_check
      _
    $region75: #{bayesian_classifier_forward.1} parent=1 // pred_check_branch
      %141 = sbr.rel (0) target = $region77
    $region76: #{bayesian_classifier_forward.1} parent=1 // pred_region
      %142 = dma.done [#allocation11], 1024
    $region77: #{bayesian_classifier_forward.1} parent=1 // pred_fallthru
      _
    // Predicated region
    $region78: #{bayesian_classifier_forward.1} parent=1 // pred_check
      _
    $region79: #{bayesian_classifier_forward.1} parent=1 // pred_check_branch
      %144 = sbr.rel (0) target = $region81
    $region80: #{bayesian_classifier_forward.1} parent=1 // pred_region
      %145 = dma.done [#allocation11], 1024
    $region81: #{bayesian_classifier_forward.1} parent=1 // pred_fallthru
      _
    // Predicated region
    $region82: #{bayesian_classifier_forward.1} parent=1 // pred_check
      _
    $region83: #{bayesian_classifier_forward.1} parent=1 // pred_check_branch
      %147 = sbr.rel (0) target = $region85
    $region84: #{bayesian_classifier_forward.1} parent=1 // pred_region
      %148 = dma.done [#allocation14], 1024
    $region85: #{bayesian_classifier_forward.1} parent=1 // pred_fallthru
      _
    %v150 = vld [vmem:[#allocation2] sm:$0xff]
    %v151 = vpack.c.bf16 %v150, %v150
    %v152 = vld [vmem:[#allocation4] sm:$0xff]
    %v153 = vpack.c.bf16 %v152, %v152
    %v154 = vld [vmem:[#allocation6] sm:$0xf]
    %v155 = vld [vmem:[#allocation6 + $0x4] sm:$0xf]
    %v156 = vld [vmem:[#allocation6 + $0x8] sm:$0xf]
    %v157 = vld [vmem:[#allocation6 + $0xc] sm:$0xf]
    %v158 = vld [vmem:[%s3] sm:$0x1]
    %v160 = vlaneseq
    %v161 = vshrl.u32 %v160, 7
    %v162 = vsub.s32 0, %v161
    %v163 = vrot.slane %v158, %v162
    %v169 = vunpack.c.l.b16 %v154
    %v170 = vunpack.c.l.b16 %v155
    %v171 = vunpack.c.l.b16 %v156
    %v172 = vunpack.c.l.b16 %v157
    %v173 = vpack.c.b16 %v170, %v169
    %v174 = vpack.c.b16 %v172, %v171
    %vm177 = vcmask 261120
    %v179 = vsel %vm177, %v151, 0
    %181 = vmatprep.subr.bf16.mxu0 0
    %182 = vmatpush1.bf16.msra.mxu0 0
    %183 = vmatprep.subr.bf16.mxu0 0
    %184 = vmatpush1.bf16.msra.mxu0 0
    %185 = vmatprep.subr.bf16.mxu0 0
    %186 = vmatpush1.bf16.msra.mxu0 0
    %187 = vmatprep.subr.bf16.mxu0 0
    %188 = vmatpush1.bf16.msra.mxu0 0
    %189 = vmatprep.subr.bf16.mxu0 0
    %190 = vmatpush1.bf16.msra.mxu0 0
    %191 = vmatprep.subr.bf16.mxu0 0
    %192 = vmatpush1.bf16.msra.mxu0 0
    %193 = vmatprep.subr.bf16.mxu0 0
    %194 = vmatpush1.bf16.msra.mxu0 %v174
    %195 = vmatprep.subr.bf16.mxu0 0
    %196 = vmatpush1.bf16.msra.mxu0 %v173
    %197 = vmatprep.subr.bf16.mxu0 0
    %198 = vmatpush2.bf16.msra.mxu0 0
    %199 = vmatprep.subr.bf16.mxu0 0
    %200 = vmatpush2.bf16.msra.mxu0 0
    %201 = vmatprep.subr.bf16.mxu0 0
    %202 = vmatpush2.bf16.msra.mxu0 0
    %203 = vmatprep.subr.bf16.mxu0 0
    %204 = vmatpush2.bf16.msra.mxu0 0
    %205 = vmatprep.subr.bf16.mxu0 0
    %206 = vmatpush2.bf16.msra.mxu0 0
    %207 = vmatprep.subr.bf16.mxu0 0
    %208 = vmatpush2.bf16.msra.mxu0 0
    %209 = vmatprep.subr.bf16.mxu0 0
    %210 = vmatpush2.bf16.msra.mxu0 0
    %211 = vmatprep.subr.bf16.mxu0 0
    %212 = vmatpush2.bf16.msra.mxu0 0
    %213 = vmatprep.mubr.bf16.mxu0 0
    %214 = vmatmul.mubr.bf16.gmra.mxu0 %v179
    %v215 = vpop.f32.mrf.mxu0
    %v216 = vadd.f32 %v163, %v215
    %v217 = vpop.f32.mrf.mxu0
    %v218 = vpop.f32.mrf.mxu0
    %v219 = vpop.f32.mrf.mxu0
    %220 = vdwg.mxu0
    %v221 = vmax.f32 %v216, 0.0
    %v222 = vpack.c.bf16 %v221, %v221
    %v223 = vld [vmem:[#allocation7] sm:$0xf]
    %v224 = vld [vmem:[#allocation7 + $0x4] sm:$0xf]
    %v225 = vld [vmem:[#allocation7 + $0x8] sm:$0xf]
    %v226 = vld [vmem:[#allocation7 + $0xc] sm:$0xf]
    %v227 = vld [vmem:[#allocation7 + $0x10] sm:$0xf]
    %v228 = vld [vmem:[#allocation7 + $0x14] sm:$0xf]
    %v229 = vld [vmem:[%s5] sm:$0x1]
    %v231 = vlaneseq
    %v232 = vshrl.u32 %v231, 7
    %v233 = vsub.s32 0, %v232
    %v234 = vrot.slane %v229, %v233
    %v242 = vunpack.c.l.b16 %v223
    %v243 = vunpack.c.l.b16 %v224
    %v244 = vunpack.c.l.b16 %v225
    %v245 = vunpack.c.l.b16 %v226
    %v246 = vunpack.c.l.b16 %v227
    %v247 = vunpack.c.l.b16 %v228
    %v248 = vpack.c.b16 %v243, %v242
    %v249 = vpack.c.b16 %v245, %v244
    %v250 = vpack.c.b16 %v247, %v246
    %vm254 = vcmask 392192
    %v256 = vsel %vm254, %v153, 0
    %258 = vmatprep.subr.bf16.mxu0 0
    %259 = vmatpush1.bf16.msra.mxu0 0
    %260 = vmatprep.subr.bf16.mxu0 0
    %261 = vmatpush1.bf16.msra.mxu0 0
    %262 = vmatprep.subr.bf16.mxu0 0
    %263 = vmatpush1.bf16.msra.mxu0 0
    %264 = vmatprep.subr.bf16.mxu0 0
    %265 = vmatpush1.bf16.msra.mxu0 0
    %266 = vmatprep.subr.bf16.mxu0 0
    %267 = vmatpush1.bf16.msra.mxu0 0
    %268 = vmatprep.subr.bf16.mxu0 0
    %269 = vmatpush1.bf16.msra.mxu0 %v250
    %270 = vmatprep.subr.bf16.mxu0 0
    %271 = vmatpush1.bf16.msra.mxu0 %v249
    %272 = vmatprep.subr.bf16.mxu0 0
    %273 = vmatpush1.bf16.msra.mxu0 %v248
    %274 = vmatprep.subr.bf16.mxu0 0
    %275 = vmatpush2.bf16.msra.mxu0 0
    %276 = vmatprep.subr.bf16.mxu0 0
    %277 = vmatpush2.bf16.msra.mxu0 0
    %278 = vmatprep.subr.bf16.mxu0 0
    %279 = vmatpush2.bf16.msra.mxu0 0
    %280 = vmatprep.subr.bf16.mxu0 0
    %281 = vmatpush2.bf16.msra.mxu0 0
    %282 = vmatprep.subr.bf16.mxu0 0
    %283 = vmatpush2.bf16.msra.mxu0 0
    %284 = vmatprep.subr.bf16.mxu0 0
    %285 = vmatpush2.bf16.msra.mxu0 0
    %286 = vmatprep.subr.bf16.mxu0 0
    %287 = vmatpush2.bf16.msra.mxu0 0
    %288 = vmatprep.subr.bf16.mxu0 0
    %289 = vmatpush2.bf16.msra.mxu0 0
    %290 = vmatprep.mubr.bf16.mxu0 0
    %291 = vmatmul.mubr.bf16.gmra.mxu0 %v256
    %v292 = vpop.f32.mrf.mxu0
    %v293 = vadd.f32 %v234, %v292
    %v294 = vpop.f32.mrf.mxu0
    %v295 = vpop.f32.mrf.mxu0
    %v296 = vpop.f32.mrf.mxu0
    %297 = vdwg.mxu0
    %v298 = vmax.f32 %v293, 0.0
    %v299 = vpack.c.bf16 %v298, %v298
    %v300 = vld [vmem:[#allocation9] sm:$0xf]
    %v301 = vld [vmem:[#allocation9 + $0x4] sm:$0xf]
    %v302 = vld [vmem:[#allocation9 + $0x8] sm:$0xf]
    %v303 = vld [vmem:[#allocation9 + $0xc] sm:$0xf]
    %v304 = vld [vmem:[#allocation9 + $0x10] sm:$0xf]
    %v305 = vld [vmem:[#allocation9 + $0x14] sm:$0xf]
    %v306 = vld [vmem:[#allocation9 + $0x18] sm:$0xf]
    %v307 = vld [vmem:[#allocation9 + $0x1c] sm:$0xf]
    %v308 = vld [vmem:[#allocation9 + $0x20] sm:$0xf]
    %v309 = vld [vmem:[#allocation9 + $0x24] sm:$0xf]
    %v310 = vld [vmem:[#allocation9 + $0x28] sm:$0xf]
    %v311 = vld [vmem:[#allocation9 + $0x2c] sm:$0xf]
    %v312 = vld [vmem:[#allocation9 + $0x30] sm:$0xf]
    %v313 = vld [vmem:[#allocation9 + $0x34] sm:$0xf]
    %v314 = vld [vmem:[#allocation9 + $0x38] sm:$0xf]
    %v315 = vld [vmem:[#allocation9 + $0x3c] sm:$0xf]
    %v316 = vld [vmem:[#allocation10] sm:$0xf]
    %v317 = vld [vmem:[#allocation10 + $0x4] sm:$0xf]
    %v318 = vld [vmem:[#allocation10 + $0x8] sm:$0xf]
    %v319 = vld [vmem:[#allocation10 + $0xc] sm:$0xf]
    %v320 = vld [vmem:[#allocation10 + $0x10] sm:$0xf]
    %v321 = vld [vmem:[#allocation10 + $0x14] sm:$0xf]
    %v322 = vld [vmem:[#allocation10 + $0x18] sm:$0xf]
    %v323 = vld [vmem:[#allocation10 + $0x1c] sm:$0xf]
    %v324 = vld [vmem:[#allocation10 + $0x20] sm:$0xf]
    %v325 = vld [vmem:[#allocation10 + $0x24] sm:$0xf]
    %v326 = vld [vmem:[#allocation10 + $0x28] sm:$0xf]
    %v327 = vld [vmem:[#allocation10 + $0x2c] sm:$0xf]
    %v328 = vld [vmem:[#allocation10 + $0x30] sm:$0xf]
    %v329 = vld [vmem:[#allocation10 + $0x34] sm:$0xf]
    %v330 = vld [vmem:[#allocation10 + $0x38] sm:$0xf]
    %v331 = vld [vmem:[#allocation10 + $0x3c] sm:$0xf]
    %v348 = vunpack.c.l.b16 %v316
    %v349 = vunpack.c.l.b16 %v317
    %v350 = vunpack.c.l.b16 %v318
    %v351 = vunpack.c.l.b16 %v319
    %v352 = vunpack.c.l.b16 %v320
    %v353 = vunpack.c.l.b16 %v321
    %v354 = vunpack.c.l.b16 %v322
    %v355 = vunpack.c.l.b16 %v323
    %v356 = vunpack.c.l.b16 %v324
    %v357 = vunpack.c.l.b16 %v325
    %v358 = vunpack.c.l.b16 %v326
    %v359 = vunpack.c.l.b16 %v327
    %v360 = vunpack.c.l.b16 %v328
    %v361 = vunpack.c.l.b16 %v329
    %v362 = vunpack.c.l.b16 %v330
    %v363 = vunpack.c.l.b16 %v331
    %v364 = vpack.c.b16 %v349, %v348
    %v365 = vpack.c.b16 %v351, %v350
    %v366 = vpack.c.b16 %v353, %v352
    %v367 = vpack.c.b16 %v355, %v354
    %v368 = vpack.c.b16 %v357, %v356
    %v369 = vpack.c.b16 %v359, %v358
    %v370 = vpack.c.b16 %v361, %v360
    %v371 = vpack.c.b16 %v363, %v362
    %380 = vmatprep.subr.bf16.mxu0 0
    %381 = vmatpush1.bf16.msra.mxu0 %v371
    %382 = vmatprep.subr.bf16.mxu0 0
    %383 = vmatpush1.bf16.msra.mxu0 %v370
    %384 = vmatprep.subr.bf16.mxu0 0
    %385 = vmatpush1.bf16.msra.mxu0 %v369
    %386 = vmatprep.subr.bf16.mxu0 0
    %387 = vmatpush1.bf16.msra.mxu0 %v368
    %388 = vmatprep.subr.bf16.mxu0 0
    %389 = vmatpush1.bf16.msra.mxu0 %v367
    %390 = vmatprep.subr.bf16.mxu0 0
    %391 = vmatpush1.bf16.msra.mxu0 %v366
    %392 = vmatprep.subr.bf16.mxu0 0
    %393 = vmatpush1.bf16.msra.mxu0 %v365
    %394 = vmatprep.subr.bf16.mxu0 0
    %395 = vmatpush1.bf16.msra.mxu0 %v364
    %396 = vmatprep.subr.bf16.mxu0 0
    %397 = vmatpush2.bf16.msra.mxu0 0
    %398 = vmatprep.subr.bf16.mxu0 0
    %399 = vmatpush2.bf16.msra.mxu0 0
    %400 = vmatprep.subr.bf16.mxu0 0
    %401 = vmatpush2.bf16.msra.mxu0 0
    %402 = vmatprep.subr.bf16.mxu0 0
    %403 = vmatpush2.bf16.msra.mxu0 0
    %404 = vmatprep.subr.bf16.mxu0 0
    %405 = vmatpush2.bf16.msra.mxu0 0
    %406 = vmatprep.subr.bf16.mxu0 0
    %407 = vmatpush2.bf16.msra.mxu0 0
    %408 = vmatprep.subr.bf16.mxu0 0
    %409 = vmatpush2.bf16.msra.mxu0 0
    %410 = vmatprep.subr.bf16.mxu0 0
    %411 = vmatpush2.bf16.msra.mxu0 0
    %412 = vmatprep.mubr.bf16.mxu0 0
    %413 = vmatmul.mubr.bf16.gmra.mxu0 %v299
    %v414 = vpop.f32.mrf.mxu0
    %v415 = vadd.f32 0.0, %v414
    %v416 = vpop.f32.mrf.mxu0
    %v417 = vpop.f32.mrf.mxu0
    %v418 = vpop.f32.mrf.mxu0
    %419 = vdwg.mxu0
    %v436 = vunpack.c.l.b16 %v300
    %v437 = vunpack.c.l.b16 %v301
    %v438 = vunpack.c.l.b16 %v302
    %v439 = vunpack.c.l.b16 %v303
    %v440 = vunpack.c.l.b16 %v304
    %v441 = vunpack.c.l.b16 %v305
    %v442 = vunpack.c.l.b16 %v306
    %v443 = vunpack.c.l.b16 %v307
    %v444 = vunpack.c.l.b16 %v308
    %v445 = vunpack.c.l.b16 %v309
    %v446 = vunpack.c.l.b16 %v310
    %v447 = vunpack.c.l.b16 %v311
    %v448 = vunpack.c.l.b16 %v312
    %v449 = vunpack.c.l.b16 %v313
    %v450 = vunpack.c.l.b16 %v314
    %v451 = vunpack.c.l.b16 %v315
    %v452 = vpack.c.b16 %v437, %v436
    %v453 = vpack.c.b16 %v439, %v438
    %v454 = vpack.c.b16 %v441, %v440
    %v455 = vpack.c.b16 %v443, %v442
    %v456 = vpack.c.b16 %v445, %v444
    %v457 = vpack.c.b16 %v447, %v446
    %v458 = vpack.c.b16 %v449, %v448
    %v459 = vpack.c.b16 %v451, %v450
    %468 = vmatprep.subr.bf16.mxu0 0
    %469 = vmatpush1.bf16.msra.mxu0 %v459
    %470 = vmatprep.subr.bf16.mxu0 0
    %471 = vmatpush1.bf16.msra.mxu0 %v458
    %472 = vmatprep.subr.bf16.mxu0 0
    %473 = vmatpush1.bf16.msra.mxu0 %v457
    %474 = vmatprep.subr.bf16.mxu0 0
    %475 = vmatpush1.bf16.msra.mxu0 %v456
    %476 = vmatprep.subr.bf16.mxu0 0
    %477 = vmatpush1.bf16.msra.mxu0 %v455
    %478 = vmatprep.subr.bf16.mxu0 0
    %479 = vmatpush1.bf16.msra.mxu0 %v454
    %480 = vmatprep.subr.bf16.mxu0 0
    %481 = vmatpush1.bf16.msra.mxu0 %v453
    %482 = vmatprep.subr.bf16.mxu0 0
    %483 = vmatpush1.bf16.msra.mxu0 %v452
    %484 = vmatprep.subr.bf16.mxu0 0
    %485 = vmatpush2.bf16.msra.mxu0 0
    %486 = vmatprep.subr.bf16.mxu0 0
    %487 = vmatpush2.bf16.msra.mxu0 0
    %488 = vmatprep.subr.bf16.mxu0 0
    %489 = vmatpush2.bf16.msra.mxu0 0
    %490 = vmatprep.subr.bf16.mxu0 0
    %491 = vmatpush2.bf16.msra.mxu0 0
    %492 = vmatprep.subr.bf16.mxu0 0
    %493 = vmatpush2.bf16.msra.mxu0 0
    %494 = vmatprep.subr.bf16.mxu0 0
    %495 = vmatpush2.bf16.msra.mxu0 0
    %496 = vmatprep.subr.bf16.mxu0 0
    %497 = vmatpush2.bf16.msra.mxu0 0
    %498 = vmatprep.subr.bf16.mxu0 0
    %499 = vmatpush2.bf16.msra.mxu0 0
    %500 = vmatprep.mubr.bf16.mxu0 0
    %501 = vmatmul.mubr.bf16.gmra.mxu0 %v222
    %v502 = vpop.f32.mrf.mxu0
    %v503 = vadd.f32 %v415, %v502
    %v504 = vpop.f32.mrf.mxu0
    %v505 = vpop.f32.mrf.mxu0
    %v506 = vpop.f32.mrf.mxu0
    %507 = vdwg.mxu0
    %v508 = vld [vmem:[%s8] sm:$0x1]
    %v510 = vlaneseq
    %v511 = vshrl.u32 %v510, 7
    %v512 = vsub.s32 0, %v511
    %v513 = vrot.slane %v508, %v512
    %v515 = vadd.f32 %v503, %v513
    %v516 = vmax.f32 %v515, 0.0
    %v517 = vpack.c.bf16 %v516, %v516
    %v518 = vld [vmem:[#allocation12] sm:$0xf]
    %v519 = vld [vmem:[#allocation12 + $0x4] sm:$0xf]
    %v520 = vld [vmem:[#allocation12 + $0x8] sm:$0xf]
    %v521 = vld [vmem:[#allocation12 + $0xc] sm:$0xf]
    %v522 = vld [vmem:[#allocation12 + $0x10] sm:$0xf]
    %v523 = vld [vmem:[#allocation12 + $0x14] sm:$0xf]
    %v524 = vld [vmem:[#allocation12 + $0x18] sm:$0xf]
    %v525 = vld [vmem:[#allocation12 + $0x1c] sm:$0xf]
    %v526 = vld [vmem:[#allocation12 + $0x20] sm:$0xf]
    %v527 = vld [vmem:[#allocation12 + $0x24] sm:$0xf]
    %v528 = vld [vmem:[#allocation12 + $0x28] sm:$0xf]
    %v529 = vld [vmem:[#allocation12 + $0x2c] sm:$0xf]
    %v530 = vld [vmem:[#allocation12 + $0x30] sm:$0xf]
    %v531 = vld [vmem:[#allocation12 + $0x34] sm:$0xf]
    %v532 = vld [vmem:[#allocation12 + $0x38] sm:$0xf]
    %v533 = vld [vmem:[#allocation12 + $0x3c] sm:$0xf]
    %v534 = vld [vmem:[%s10] sm:$0x1]
    %v536 = vlaneseq
    %v537 = vshrl.u32 %v536, 7
    %v538 = vsub.s32 0, %v537
    %v539 = vrot.slane %v534, %v538
    %v557 = vunpack.c.l.b16 %v518
    %v558 = vunpack.c.l.b16 %v519
    %v559 = vunpack.c.l.b16 %v520
    %v560 = vunpack.c.l.b16 %v521
    %v561 = vunpack.c.l.b16 %v522
    %v562 = vunpack.c.l.b16 %v523
    %v563 = vunpack.c.l.b16 %v524
    %v564 = vunpack.c.l.b16 %v525
    %v565 = vunpack.c.l.b16 %v526
    %v566 = vunpack.c.l.b16 %v527
    %v567 = vunpack.c.l.b16 %v528
    %v568 = vunpack.c.l.b16 %v529
    %v569 = vunpack.c.l.b16 %v530
    %v570 = vunpack.c.l.b16 %v531
    %v571 = vunpack.c.l.b16 %v532
    %v572 = vunpack.c.l.b16 %v533
    %v573 = vpack.c.b16 %v558, %v557
    %v574 = vpack.c.b16 %v560, %v559
    %v575 = vpack.c.b16 %v562, %v561
    %v576 = vpack.c.b16 %v564, %v563
    %v577 = vpack.c.b16 %v566, %v565
    %v578 = vpack.c.b16 %v568, %v567
    %v579 = vpack.c.b16 %v570, %v569
    %v580 = vpack.c.b16 %v572, %v571
    %589 = vmatprep.subr.bf16.mxu0 0
    %590 = vmatpush1.bf16.msra.mxu0 %v580
    %591 = vmatprep.subr.bf16.mxu0 0
    %592 = vmatpush1.bf16.msra.mxu0 %v579
    %593 = vmatprep.subr.bf16.mxu0 0
    %594 = vmatpush1.bf16.msra.mxu0 %v578
    %595 = vmatprep.subr.bf16.mxu0 0
    %596 = vmatpush1.bf16.msra.mxu0 %v577
    %597 = vmatprep.subr.bf16.mxu0 0
    %598 = vmatpush1.bf16.msra.mxu0 %v576
    %599 = vmatprep.subr.bf16.mxu0 0
    %600 = vmatpush1.bf16.msra.mxu0 %v575
    %601 = vmatprep.subr.bf16.mxu0 0
    %602 = vmatpush1.bf16.msra.mxu0 %v574
    %603 = vmatprep.subr.bf16.mxu0 0
    %604 = vmatpush1.bf16.msra.mxu0 %v573
    %605 = vmatprep.subr.bf16.mxu0 0
    %606 = vmatpush2.bf16.msra.mxu0 0
    %607 = vmatprep.subr.bf16.mxu0 0
    %608 = vmatpush2.bf16.msra.mxu0 0
    %609 = vmatprep.subr.bf16.mxu0 0
    %610 = vmatpush2.bf16.msra.mxu0 0
    %611 = vmatprep.subr.bf16.mxu0 0
    %612 = vmatpush2.bf16.msra.mxu0 0
    %613 = vmatprep.subr.bf16.mxu0 0
    %614 = vmatpush2.bf16.msra.mxu0 0
    %615 = vmatprep.subr.bf16.mxu0 0
    %616 = vmatpush2.bf16.msra.mxu0 0
    %617 = vmatprep.subr.bf16.mxu0 0
    %618 = vmatpush2.bf16.msra.mxu0 0
    %619 = vmatprep.subr.bf16.mxu0 0
    %620 = vmatpush2.bf16.msra.mxu0 0
    %621 = vmatprep.mubr.bf16.mxu0 0
    %622 = vmatmul.mubr.bf16.gmra.mxu0 %v517
    %v623 = vpop.f32.mrf.mxu0
    %v624 = vadd.f32 %v539, %v623
    %v625 = vpop.f32.mrf.mxu0
    %v626 = vpop.f32.mrf.mxu0
    %v627 = vpop.f32.mrf.mxu0
    %628 = vdwg.mxu0
    %v629 = vmax.f32 %v624, 0.0
    %v630 = vpack.c.bf16 %v629, %v629
    %v631 = vld [vmem:[#allocation13] sm:$0xf]
    %v632 = vld [vmem:[#allocation13 + $0x4] sm:$0xf]
    %v633 = vld [vmem:[#allocation13 + $0x8] sm:$0xf]
    %v634 = vld [vmem:[#allocation13 + $0xc] sm:$0xf]
    %v635 = vld [vmem:[#allocation13 + $0x10] sm:$0xf]
    %v636 = vld [vmem:[#allocation13 + $0x14] sm:$0xf]
    %v637 = vld [vmem:[#allocation13 + $0x18] sm:$0xf]
    %v638 = vld [vmem:[#allocation13 + $0x1c] sm:$0xf]
    %v639 = vld [vmem:[#allocation13 + $0x20] sm:$0xf]
    %v640 = vld [vmem:[#allocation13 + $0x24] sm:$0xf]
    %v641 = vld [vmem:[#allocation13 + $0x28] sm:$0xf]
    %v642 = vld [vmem:[#allocation13 + $0x2c] sm:$0xf]
    %v643 = vld [vmem:[#allocation13 + $0x30] sm:$0xf]
    %v644 = vld [vmem:[#allocation13 + $0x34] sm:$0xf]
    %v645 = vld [vmem:[#allocation13 + $0x38] sm:$0xf]
    %v646 = vld [vmem:[#allocation13 + $0x3c] sm:$0xf]
    %v647 = vld [vmem:[%s12] sm:$0x1]
    %v649 = vlaneseq
    %v650 = vshrl.u32 %v649, 7
    %v651 = vsub.s32 0, %v650
    %v652 = vrot.slane %v647, %v651
    %v670 = vunpack.c.l.b16 %v631
    %v671 = vunpack.c.l.b16 %v632
    %v672 = vunpack.c.l.b16 %v633
    %v673 = vunpack.c.l.b16 %v634
    %v674 = vunpack.c.l.b16 %v635
    %v675 = vunpack.c.l.b16 %v636
    %v676 = vunpack.c.l.b16 %v637
    %v677 = vunpack.c.l.b16 %v638
    %v678 = vunpack.c.l.b16 %v639
    %v679 = vunpack.c.l.b16 %v640
    %v680 = vunpack.c.l.b16 %v641
    %v681 = vunpack.c.l.b16 %v642
    %v682 = vunpack.c.l.b16 %v643
    %v683 = vunpack.c.l.b16 %v644
    %v684 = vunpack.c.l.b16 %v645
    %v685 = vunpack.c.l.b16 %v646
    %v686 = vpack.c.b16 %v671, %v670
    %v687 = vpack.c.b16 %v673, %v672
    %v688 = vpack.c.b16 %v675, %v674
    %v689 = vpack.c.b16 %v677, %v676
    %v690 = vpack.c.b16 %v679, %v678
    %v691 = vpack.c.b16 %v681, %v680
    %v692 = vpack.c.b16 %v683, %v682
    %v693 = vpack.c.b16 %v685, %v684
    %702 = vmatprep.subr.bf16.mxu0 0
    %703 = vmatpush1.bf16.msra.mxu0 %v693
    %704 = vmatprep.subr.bf16.mxu0 0
    %705 = vmatpush1.bf16.msra.mxu0 %v692
    %706 = vmatprep.subr.bf16.mxu0 0
    %707 = vmatpush1.bf16.msra.mxu0 %v691
    %708 = vmatprep.subr.bf16.mxu0 0
    %709 = vmatpush1.bf16.msra.mxu0 %v690
    %710 = vmatprep.subr.bf16.mxu0 0
    %711 = vmatpush1.bf16.msra.mxu0 %v689
    %712 = vmatprep.subr.bf16.mxu0 0
    %713 = vmatpush1.bf16.msra.mxu0 %v688
    %714 = vmatprep.subr.bf16.mxu0 0
    %715 = vmatpush1.bf16.msra.mxu0 %v687
    %716 = vmatprep.subr.bf16.mxu0 0
    %717 = vmatpush1.bf16.msra.mxu0 %v686
    %718 = vmatprep.subr.bf16.mxu0 0
    %719 = vmatpush2.bf16.msra.mxu0 0
    %720 = vmatprep.subr.bf16.mxu0 0
    %721 = vmatpush2.bf16.msra.mxu0 0
    %722 = vmatprep.subr.bf16.mxu0 0
    %723 = vmatpush2.bf16.msra.mxu0 0
    %724 = vmatprep.subr.bf16.mxu0 0
    %725 = vmatpush2.bf16.msra.mxu0 0
    %726 = vmatprep.subr.bf16.mxu0 0
    %727 = vmatpush2.bf16.msra.mxu0 0
    %728 = vmatprep.subr.bf16.mxu0 0
    %729 = vmatpush2.bf16.msra.mxu0 0
    %730 = vmatprep.subr.bf16.mxu0 0
    %731 = vmatpush2.bf16.msra.mxu0 0
    %732 = vmatprep.subr.bf16.mxu0 0
    %733 = vmatpush2.bf16.msra.mxu0 0
    %734 = vmatprep.mubr.bf16.mxu0 0
    %735 = vmatmul.mubr.bf16.gmra.mxu0 %v630
    %v736 = vpop.f32.mrf.mxu0
    %v737 = vadd.f32 %v652, %v736
    %v738 = vpop.f32.mrf.mxu0
    %v739 = vpop.f32.mrf.mxu0
    %v740 = vpop.f32.mrf.mxu0
    %741 = vdwg.mxu0
    %v742 = vpack.c.bf16 %v737, %v737
    %743 = vst [vmem:[%s13] sm:$0xf] %v742
    // Predicated region
    $region86: #{bayesian_classifier_forward.1} parent=1 // pred_check
      _
    $region87: #{bayesian_classifier_forward.1} parent=1 // pred_check_branch
      %745 = sbr.rel (0) target = $region89
    $region88: #{bayesian_classifier_forward.1} parent=1 // pred_region
      _
    $region89: #{bayesian_classifier_forward.1} parent=1 // pred_fallthru
      _
    // Predicated region
    $region90: #{bayesian_classifier_forward.1} parent=1 // pred_check
      _
    $region91: #{bayesian_classifier_forward.1} parent=1 // pred_check_branch
      %747 = sbr.rel (0) target = $region93
    $region92: #{bayesian_classifier_forward.1} parent=1 // pred_region
      _
    $region93: #{bayesian_classifier_forward.1} parent=1 // pred_fallthru
      _
    %748 = vsyncpa [#allocation3], 1
    %749 = vsyncpa [#allocation5], 1
    %750 = vsyncpa [#allocation8], 1
    %751 = vsyncpa [#allocation11], 1
    %752 = vsyncpa [#allocation14], 1

</llo_original>
